<compile_context>
chip_gen: v5e
topology: v5e:2x2
jax: 0.10.0
libtpu: 0.0.40
codegen_flags: <defaults>
</compile_context>

<pallas_src>
import numpy as np
import jax
import jax.numpy as jnp
from jax import lax
from jax.experimental import pallas as pl
from jax.experimental.pallas import tpu as pltpu

_LOG2 = float(np.log(2.0))


def _round_up(x, m):
    return ((x + m - 1) // m) * m


def _choose_tile(M, D, N, tn_req=None):
    """Pick the node-tile size tn (lane axis) and a scoped-VMEM request."""
    M_pad = _round_up(max(M, 1), 8)
    # Per-tn-row VMEM bytes: 2 inputs x 2 buffers x D x 4B of h tiles,
    # 2 accumulators + ~5 temporaries of (M_pad, tn) f32, plus the batch slice.
    per_tn = 16 * D + 28 * M_pad + 64
    if tn_req is not None:
        tn = max(128, (int(tn_req) // 128) * 128)
    else:
        # Target >= ~2 MiB of streamed h-bytes (h1+h2, f32) per grid step so the
        # pipeline is DMA-bound rather than per-step-overhead-bound.
        tn = max(512, ((2 * 1024 * 1024) // (8 * D) // 128) * 128)
        # VMEM working-set budget (~18 MiB keeps headroom on v7x's 64 MiB).
        budget = 18 * 1024 * 1024 - 16 * M_pad * D
        tn_budget = max(128, (budget // per_tn // 128) * 128)
        tn = min(tn, tn_budget)
        # TODO(synk): for very large M the budget forces tn down; an M-tiling
        # grid axis would be the better fix there.
    tn = max(128, min(tn, _round_up(N, 128)))
    est = per_tn * tn + 16 * M_pad * D
    vmem_limit = int(min(56 * 1024 * 1024, max(32 * 1024 * 1024, 2 * est)))
    return tn, vmem_limit


def _fused_jsd_sums(g1, g2, h1, h2, batch, *, tn=None):
    """Returns (pos_sum, neg_sum) summed over BOTH views (g1.h2 and g2.h1).

    pos_sum = sum(log2 - softplus(-sim * pos_mask))
    neg_sum = sum(softplus(-sim*neg_mask) + sim*neg_mask - log2)
    """
    M, D = g1.shape
    N = h1.shape[0]
    tn, vmem_limit = _choose_tile(M, D, N, tn)
    T = pl.cdiv(N, tn)        # number of node tiles (last one may be partial)
    rem = N % tn              # static; != 0 => last tile has OOB columns to mask

    batch2d = batch.astype(jnp.int32).reshape(1, N)

    def kernel(g1_ref, g2_ref, h1_ref, h2_ref, b_ref, pos_out, neg_out,
               acc_pos, acc_neg):
        i = pl.program_id(0)

        @pl.when(i == 0)
        def _():
            acc_pos[...] = jnp.zeros_like(acc_pos)
            acc_neg[...] = jnp.zeros_like(acc_neg)

        # One-hot positive mask rebuilt in-kernel from batch assignments: (M, tn).
        gid = lax.broadcasted_iota(jnp.int32, (M, tn), 0)
        pos = (gid == b_ref[...]).astype(jnp.float32)

        dn = (((1,), (1,)), ((), ()))   # contract the feature dim of both operands
        sim1 = lax.dot_general(g1_ref[...], h2_ref[...], dn,
                               preferred_element_type=jnp.float32)   # (M, tn)
        sim2 = lax.dot_general(g2_ref[...], h1_ref[...], dn,
                               preferred_element_type=jnp.float32)   # (M, tn)

        def terms(sim):
            # single softplus per element; identities valid for {0,1} masks
            spm = (jnp.maximum(sim, 0.0)
                   + jnp.log1p(jnp.exp(-jnp.abs(sim))) - _LOG2)      # softplus(sim)-log2
            return pos * (sim - spm), spm - pos * spm
        # TODO(synk): for M < 8 the two views could be fused along the sublane
        # axis to halve VPU/EUP vreg work; skipped (DMA-bound for typical G2L).

        p1, n1 = terms(sim1)
        p2, n2 = terms(sim2)
        dpos = p1 + p2
        dneg = n1 + n2

        if rem:   # only emitted when N is not tile-aligned (trace-time gate)
            lane = lax.broadcasted_iota(jnp.int32, (M, tn), 1)
            in_bounds = (i * tn + lane) < N
            # Masking the *final* terms makes the result exact and keeps any
            # garbage/NaN from the clipped edge block out of the accumulators.
            dpos = jnp.where(in_bounds, dpos, 0.0)
            dneg = jnp.where(in_bounds, dneg, 0.0)

        acc_pos[...] += dpos
        acc_neg[...] += dneg

        @pl.when(i == pl.num_programs(0) - 1)
        def _():
            pos_out[...] = jnp.sum(acc_pos[...], keepdims=True)
            neg_out[...] = jnp.sum(acc_neg[...], keepdims=True)

    cost = pl.CostEstimate(
        flops=4 * M * N * D,            # two (M,D)x(D,N) matmuls, two views
        transcendentals=4 * M * N,      # exp + log1p per element, two views
        bytes_accessed=8 * N * D + 16 * M * D + 4 * N + 8,
    )

    pos_sum, neg_sum = pl.pallas_call(
        kernel,
        out_shape=(jax.ShapeDtypeStruct((1, 1), jnp.float32),
                   jax.ShapeDtypeStruct((1, 1), jnp.float32)),
        grid_spec=pltpu.PrefetchScalarGridSpec(
            num_scalar_prefetch=0,
            grid=(T,),
            in_specs=[
                pl.BlockSpec((M, D), lambda i: (0, 0)),     # g1 resident
                pl.BlockSpec((M, D), lambda i: (0, 0)),     # g2 resident
                pl.BlockSpec((tn, D), lambda i: (i, 0)),    # h1 node tile
                pl.BlockSpec((tn, D), lambda i: (i, 0)),    # h2 node tile
                pl.BlockSpec((1, tn), lambda i: (0, i)),    # batch slice
            ],
            out_specs=[
                pl.BlockSpec((1, 1), lambda i: (0, 0)),
                pl.BlockSpec((1, 1), lambda i: (0, 0)),
            ],
            scratch_shapes=[pltpu.VMEM((M, tn), jnp.float32),
                            pltpu.VMEM((M, tn), jnp.float32)],
        ),
        compiler_params=pltpu.CompilerParams(
            dimension_semantics=("arbitrary",),
            vmem_limit_bytes=vmem_limit),
        cost_estimate=cost,
    )(g1, g2, h1, h2, batch2d)

    return jnp.sum(pos_sum), jnp.sum(neg_sum)


def dual_branch_contrast_g2l(h1, h2, g1, g2, batch,
                             extra_pos_mask=None, extra_neg_mask=None, *, tn=None):
    """DualBranchContrast(loss=JSD, mode='G2L', intraview_negs=False).forward"""
    # TODO(synk): extra_pos_mask / extra_neg_mask are not supported (add_extra_mask
    # with None/None is the identity); non-{0,1} masks would invalidate the fused
    # single-softplus identity used inside the kernel.
    assert extra_pos_mask is None and extra_neg_mask is None
    M = g1.shape[0]
    N = h1.shape[0]
    pos_sum, neg_sum = _fused_jsd_sums(g1, g2, h1, h2, batch, tn=tn)
    b = batch.astype(jnp.int32)
    # Denominators equal the reference mask sums (no mask materialization needed).
    num_pos = jnp.sum((b >= 0) & (b < M)).astype(jnp.float32)     # == pos_mask.sum()
    num_neg = jnp.asarray(M * N, jnp.float32) - num_pos           # == neg_mask.sum()
    e_pos = pos_sum / num_pos
    e_neg = neg_sum / num_neg
    # 0.5 * (l1 + l2); both views share the same denominators.
    return 0.5 * (e_neg - e_pos)


# ---- pure-JAX reference (for correctness check only) ----
def _jsd_ref(anchor, sample, pos_mask, neg_mask):
    sim = anchor @ sample.T
    e_pos = jnp.sum(_LOG2 - jax.nn.softplus(-sim * pos_mask)) / pos_mask.sum()
    neg_sim = sim * neg_mask
    e_neg = jnp.sum(jax.nn.softplus(-neg_sim) + neg_sim - _LOG2) / neg_mask.sum()
    return e_neg - e_pos


def _ref_forward(h1, h2, g1, g2, batch):
    M = g1.shape[0]
    pos_mask = (batch[None, :] == jnp.arange(M, dtype=batch.dtype)[:, None]).astype(jnp.float32)
    neg_mask = 1.0 - pos_mask
    return 0.5 * (_jsd_ref(g1, h2, pos_mask, neg_mask) + _jsd_ref(g2, h1, pos_mask, neg_mask))


if __name__ == "__main__":
    # Small demo shapes: N nodes, M graphs, D hidden. Exercises a single partial tile.
    N, M, D = 16, 2, 32
    k1, k2, k3, k4 = jax.random.split(jax.random.PRNGKey(0), 4)
    h1 = jax.random.normal(k1, (N, D), dtype=jnp.float32)
    h2 = jax.random.normal(k2, (N, D), dtype=jnp.float32)
    g1 = jax.random.normal(k3, (M, D), dtype=jnp.float32)
    g2 = jax.random.normal(k4, (M, D), dtype=jnp.float32)
    batch = jnp.repeat(jnp.arange(M, dtype=jnp.int32), N // M)

    out = jax.block_until_ready(jax.jit(dual_branch_contrast_g2l)(h1, h2, g1, g2, batch))
    ref = _ref_forward(h1, h2, g1, g2, batch)
    np.testing.assert_allclose(np.asarray(out), np.asarray(ref), rtol=2e-4, atol=2e-4)

    # Larger, tile-aligned check (auto tn, unsorted batch).
    N2, M2, D2 = 2048, 4, 64
    k5, k6, k7, k8, k9 = jax.random.split(jax.random.PRNGKey(1), 5)
    h1b = jax.random.normal(k5, (N2, D2), dtype=jnp.float32)
    h2b = jax.random.normal(k6, (N2, D2), dtype=jnp.float32)
    g1b = jax.random.normal(k7, (M2, D2), dtype=jnp.float32)
    g2b = jax.random.normal(k8, (M2, D2), dtype=jnp.float32)
    batch_b = jax.random.randint(k9, (N2,), 0, M2, dtype=jnp.int32)
    out_b = jax.block_until_ready(jax.jit(dual_branch_contrast_g2l)(h1b, h2b, g1b, g2b, batch_b))
    ref_b = _ref_forward(h1b, h2b, g1b, g2b, batch_b)
    np.testing.assert_allclose(np.asarray(out_b), np.asarray(ref_b), rtol=2e-4, atol=2e-4)

    # Ragged check: N not a multiple of tn -> multi-step accumulation + in-kernel
    # bounds masking of the partial last tile (no wrapper-side padding anywhere).
    N3, M3, D3 = 1000, 3, 64
    ka, kb, kc, kd, ke = jax.random.split(jax.random.PRNGKey(2), 5)
    h1c = jax.random.normal(ka, (N3, D3), dtype=jnp.float32)
    h2c = jax.random.normal(kb, (N3, D3), dtype=jnp.float32)
    g1c = jax.random.normal(kc, (M3, D3), dtype=jnp.float32)
    g2c = jax.random.normal(kd, (M3, D3), dtype=jnp.float32)
    batch_c = jax.random.randint(ke, (N3,), 0, M3, dtype=jnp.int32)
    fn_c = jax.jit(lambda *a: dual_branch_contrast_g2l(*a, tn=256))
    out_c = jax.block_until_ready(fn_c(h1c, h2c, g1c, g2c, batch_c))
    ref_c = _ref_forward(h1c, h2c, g1c, g2c, batch_c)
    np.testing.assert_allclose(np.asarray(out_c), np.asarray(ref_c), rtol=2e-4, atol=2e-4)

    print("KERNEL_OK")
</pallas_src>

<mosaic_0001>
module attributes {stable_mosaic.version = 11 : i64} {
  func.func @kernel(%arg0: i32, %arg1: memref<2x32xf32, #tpu.memory_space<vmem>>, %arg2: memref<2x32xf32, #tpu.memory_space<vmem>>, %arg3: memref<128x32xf32, #tpu.memory_space<vmem>>, %arg4: memref<128x32xf32, #tpu.memory_space<vmem>>, %arg5: memref<1x128xi32, #tpu.memory_space<vmem>>, %arg6: memref<1x1xf32, #tpu.memory_space<vmem>>, %arg7: memref<1x1xf32, #tpu.memory_space<vmem>>, %arg8: memref<2x128xf32, #tpu.memory_space<vmem>>, %arg9: memref<2x128xf32, #tpu.memory_space<vmem>>) attributes {dimension_semantics = [#tpu.dimension_semantics<arbitrary>], iteration_bounds = array<i64: 1>, scalar_prefetch = 0 : i64, scratch_operands = 2 : i64, tpu.core_type = #tpu.core_type<tc>, window_params = [{pipeline_mode = #tpu.pipeline_mode<synchronous>, transform_indices = @transform_0, window_bounds = array<i64: 2, 32>}, {pipeline_mode = #tpu.pipeline_mode<synchronous>, transform_indices = @transform_1, window_bounds = array<i64: 2, 32>}, {transform_indices = @transform_2, window_bounds = array<i64: 128, 32>}, {transform_indices = @transform_3, window_bounds = array<i64: 128, 32>}, {transform_indices = @transform_4, window_bounds = array<i64: 1, 128>}, {pipeline_mode = #tpu.pipeline_mode<synchronous>, transform_indices = @transform_5, window_bounds = array<i64: 1, 1>}, {pipeline_mode = #tpu.pipeline_mode<synchronous>, transform_indices = @transform_6, window_bounds = array<i64: 1, 1>}]} {
    %c0_i32 = arith.constant 0 : i32
    %0 = arith.cmpi eq, %arg0, %c0_i32 : i32
    %1 = arith.extui %0 : i1 to i32
    %c0_i32_0 = arith.constant 0 : i32
    %2 = arith.cmpi ne, %1, %c0_i32_0 : i32
    scf.if %2 {
      %cst_29 = arith.constant 0.000000e+00 : f32
      %64 = vector.broadcast %cst_29 : f32 to vector<2x128xf32>
      %c0_30 = arith.constant 0 : index
      %c0_31 = arith.constant 0 : index
      %65 = vector.load %arg8[%c0_30, %c0_31] : memref<2x128xf32, #tpu.memory_space<vmem>>, vector<2x128xf32>
      tpu.vector_store %arg8[%c0_30, %c0_31], %64 {strides = array<i32>} : memref<2x128xf32, #tpu.memory_space<vmem>>, vector<2x128xf32>,
      %cst_32 = arith.constant 0.000000e+00 : f32
      %66 = vector.broadcast %cst_32 : f32 to vector<2x128xf32>
      %c0_33 = arith.constant 0 : index
      %c0_34 = arith.constant 0 : index
      %67 = vector.load %arg9[%c0_33, %c0_34] : memref<2x128xf32, #tpu.memory_space<vmem>>, vector<2x128xf32>
      tpu.vector_store %arg9[%c0_33, %c0_34], %66 {strides = array<i32>} : memref<2x128xf32, #tpu.memory_space<vmem>>, vector<2x128xf32>,
    } else {
    }
    %3 = tpu.iota {dimensions = array<i32: 0>} : vector<2x128xi32>
    %c0 = arith.constant 0 : index
    %c0_1 = arith.constant 0 : index
    %4 = vector.load %arg5[%c0, %c0_1] : memref<1x128xi32, #tpu.memory_space<vmem>>, vector<1x128xi32>
    %5 = vector.broadcast %4 : vector<1x128xi32> to vector<2x128xi32>
    %6 = arith.cmpi eq, %3, %5 : vector<2x128xi32>
    %7 = arith.extui %6 : vector<2x128xi1> to vector<2x128xi32>
    %8 = arith.sitofp %7 : vector<2x128xi32> to vector<2x128xf32>
    %c0_2 = arith.constant 0 : index
    %c0_3 = arith.constant 0 : index
    %9 = vector.load %arg1[%c0_2, %c0_3] : memref<2x32xf32, #tpu.memory_space<vmem>>, vector<2x32xf32>
    %c0_4 = arith.constant 0 : index
    %c0_5 = arith.constant 0 : index
    %10 = vector.load %arg4[%c0_4, %c0_5] : memref<128x32xf32, #tpu.memory_space<vmem>>, vector<128x32xf32>
    %cst = arith.constant dense<0.000000e+00> : vector<2x128xf32>
    %11 = tpu.matmul %9, %10, %cst {dimension_numbers = #tpu.dot_dimension_numbers<[1], [1], [0], [0], [0, 0, 1, 0], [], []>} : vector<2x32xf32>, vector<128x32xf32>, vector<2x128xf32> -> vector<2x128xf32>
    %c0_6 = arith.constant 0 : index
    %c0_7 = arith.constant 0 : index
    %12 = vector.load %arg2[%c0_6, %c0_7] : memref<2x32xf32, #tpu.memory_space<vmem>>, vector<2x32xf32>
    %c0_8 = arith.constant 0 : index
    %c0_9 = arith.constant 0 : index
    %13 = vector.load %arg3[%c0_8, %c0_9] : memref<128x32xf32, #tpu.memory_space<vmem>>, vector<128x32xf32>
    %cst_10 = arith.constant dense<0.000000e+00> : vector<2x128xf32>
    %14 = tpu.matmul %12, %13, %cst_10 {dimension_numbers = #tpu.dot_dimension_numbers<[1], [1], [0], [0], [0, 0, 1, 0], [], []>} : vector<2x32xf32>, vector<128x32xf32>, vector<2x128xf32> -> vector<2x128xf32>
    %cst_11 = arith.constant 0.000000e+00 : f32
    %15 = vector.broadcast %cst_11 : f32 to vector<2x128xf32>
    %16 = arith.maximumf %11, %15 : vector<2x128xf32>
    %17 = math.absf %11 : vector<2x128xf32>
    %cst_12 = arith.constant 0.000000e+00 : f32
    %18 = vector.broadcast %cst_12 : f32 to vector<2x128xf32>
    %19 = arith.subf %18, %17 : vector<2x128xf32>
    %20 = math.exp %19 : vector<2x128xf32>
    %21 = math.log1p %20 : vector<2x128xf32>
    %22 = arith.addf %16, %21 : vector<2x128xf32>
    %cst_13 = arith.constant 0.693147182 : f32
    %23 = vector.broadcast %cst_13 : f32 to vector<2x128xf32>
    %24 = arith.subf %22, %23 : vector<2x128xf32>
    %25 = arith.subf %11, %24 : vector<2x128xf32>
    %26 = arith.mulf %8, %25 : vector<2x128xf32>
    %27 = arith.mulf %8, %24 : vector<2x128xf32>
    %28 = arith.subf %24, %27 : vector<2x128xf32>
    %cst_14 = arith.constant 0.000000e+00 : f32
    %29 = vector.broadcast %cst_14 : f32 to vector<2x128xf32>
    %30 = arith.maximumf %14, %29 : vector<2x128xf32>
    %31 = math.absf %14 : vector<2x128xf32>
    %cst_15 = arith.constant 0.000000e+00 : f32
    %32 = vector.broadcast %cst_15 : f32 to vector<2x128xf32>
    %33 = arith.subf %32, %31 : vector<2x128xf32>
    %34 = math.exp %33 : vector<2x128xf32>
    %35 = math.log1p %34 : vector<2x128xf32>
    %36 = arith.addf %30, %35 : vector<2x128xf32>
    %cst_16 = arith.constant 0.693147182 : f32
    %37 = vector.broadcast %cst_16 : f32 to vector<2x128xf32>
    %38 = arith.subf %36, %37 : vector<2x128xf32>
    %39 = arith.subf %14, %38 : vector<2x128xf32>
    %40 = arith.mulf %8, %39 : vector<2x128xf32>
    %41 = arith.mulf %8, %38 : vector<2x128xf32>
    %42 = arith.subf %38, %41 : vector<2x128xf32>
    %43 = arith.addf %26, %40 : vector<2x128xf32>
    %44 = arith.addf %28, %42 : vector<2x128xf32>
    %45 = tpu.iota {dimensions = array<i32: 1>} : vector<2x128xi32>
    %c128_i32 = arith.constant 128 : i32
    %46 = arith.muli %arg0, %c128_i32 : i32
    %47 = vector.broadcast %46 : i32 to vector<2x128xi32>
    %48 = arith.addi %47, %45 : vector<2x128xi32>
    %c16_i32 = arith.constant 16 : i32
    %49 = vector.broadcast %c16_i32 : i32 to vector<2x128xi32>
    %50 = arith.cmpi slt, %48, %49 : vector<2x128xi32>
    %cst_17 = arith.constant 0.000000e+00 : f32
    %51 = vector.broadcast %cst_17 : f32 to vector<2x128xf32>
    %52 = arith.select %50, %43, %51 : vector<2x128xi1>, vector<2x128xf32>
    %cst_18 = arith.constant 0.000000e+00 : f32
    %53 = vector.broadcast %cst_18 : f32 to vector<2x128xf32>
    %54 = arith.select %50, %44, %53 : vector<2x128xi1>, vector<2x128xf32>
    %c0_19 = arith.constant 0 : index
    %c0_20 = arith.constant 0 : index
    %55 = vector.load %arg8[%c0_19, %c0_20] : memref<2x128xf32, #tpu.memory_space<vmem>>, vector<2x128xf32>
    %56 = arith.addf %55, %52 : vector<2x128xf32>
    %c0_21 = arith.constant 0 : index
    %c0_22 = arith.constant 0 : index
    %57 = vector.load %arg8[%c0_21, %c0_22] : memref<2x128xf32, #tpu.memory_space<vmem>>, vector<2x128xf32>
    tpu.vector_store %arg8[%c0_21, %c0_22], %56 {strides = array<i32>} : memref<2x128xf32, #tpu.memory_space<vmem>>, vector<2x128xf32>,
    %c0_23 = arith.constant 0 : index
    %c0_24 = arith.constant 0 : index
    %58 = vector.load %arg9[%c0_23, %c0_24] : memref<2x128xf32, #tpu.memory_space<vmem>>, vector<2x128xf32>
    %59 = arith.addf %58, %54 : vector<2x128xf32>
    %c0_25 = arith.constant 0 : index
    %c0_26 = arith.constant 0 : index
    %60 = vector.load %arg9[%c0_25, %c0_26] : memref<2x128xf32, #tpu.memory_space<vmem>>, vector<2x128xf32>
    tpu.vector_store %arg9[%c0_25, %c0_26], %59 {strides = array<i32>} : memref<2x128xf32, #tpu.memory_space<vmem>>, vector<2x128xf32>,
    %c0_i32_27 = arith.constant 0 : i32
    %61 = arith.cmpi eq, %arg0, %c0_i32_27 : i32
    %62 = arith.extui %61 : i1 to i32
    %c0_i32_28 = arith.constant 0 : i32
    %63 = arith.cmpi ne, %62, %c0_i32_28 : i32
    scf.if %63 {
      %c0_29 = arith.constant 0 : index
      %c0_30 = arith.constant 0 : index
      %64 = vector.load %arg8[%c0_29, %c0_30] : memref<2x128xf32, #tpu.memory_space<vmem>>, vector<2x128xf32>
      %65 = vector.shape_cast %64 : vector<2x128xf32> to vector<1x2x128xf32>
      %cst_31 = arith.constant dense<0.000000e+00> : vector<1xf32>
      %66 = vector.multi_reduction <add>, %65, %cst_31 [1, 2] : vector<1x2x128xf32> to vector<1xf32>
      %67 = vector.shape_cast %66 : vector<1xf32> to vector<1x1x1xf32>
      %68 = vector.extract %67[0, 0, 0] : f32 from vector<1x1x1xf32>
      %69 = vector.broadcast %68 : f32 to vector<1x1xf32>
      %c0_32 = arith.constant 0 : index
      %c0_33 = arith.constant 0 : index
      %70 = vector.load %arg6[%c0_32, %c0_33] : memref<1x1xf32, #tpu.memory_space<vmem>>, vector<1x1xf32>
      tpu.vector_store %arg6[%c0_32, %c0_33], %69 {strides = array<i32>} : memref<1x1xf32, #tpu.memory_space<vmem>>, vector<1x1xf32>,
      %c0_34 = arith.constant 0 : index
      %c0_35 = arith.constant 0 : index
      %71 = vector.load %arg9[%c0_34, %c0_35] : memref<2x128xf32, #tpu.memory_space<vmem>>, vector<2x128xf32>
      %72 = vector.shape_cast %71 : vector<2x128xf32> to vector<1x2x128xf32>
      %cst_36 = arith.constant dense<0.000000e+00> : vector<1xf32>
      %73 = vector.multi_reduction <add>, %72, %cst_36 [1, 2] : vector<1x2x128xf32> to vector<1xf32>
      %74 = vector.shape_cast %73 : vector<1xf32> to vector<1x1x1xf32>
      %75 = vector.extract %74[0, 0, 0] : f32 from vector<1x1x1xf32>
      %76 = vector.broadcast %75 : f32 to vector<1x1xf32>
      %c0_37 = arith.constant 0 : index
      %c0_38 = arith.constant 0 : index
      %77 = vector.load %arg7[%c0_37, %c0_38] : memref<1x1xf32, #tpu.memory_space<vmem>>, vector<1x1xf32>
      tpu.vector_store %arg7[%c0_37, %c0_38], %76 {strides = array<i32>} : memref<1x1xf32, #tpu.memory_space<vmem>>, vector<1x1xf32>,
    } else {
    }
    return
  }
  func.func @transform_0(%arg0: i32) -> (i32, i32) {
    %c0_i32 = arith.constant 0 : i32
    %c0_i32_0 = arith.constant 0 : i32
    %c0_i32_1 = arith.constant 0 : i32
    return %c0_i32, %c0_i32_0 : i32, i32
  }
  func.func @transform_1(%arg0: i32) -> (i32, i32) {
    %c0_i32 = arith.constant 0 : i32
    %c0_i32_0 = arith.constant 0 : i32
    %c0_i32_1 = arith.constant 0 : i32
    return %c0_i32, %c0_i32_0 : i32, i32
  }
  func.func @transform_2(%arg0: i32) -> (i32, i32) {
    %c0_i32 = arith.constant 0 : i32
    %c0_i32_0 = arith.constant 0 : i32
    return %arg0, %c0_i32 : i32, i32
  }
  func.func @transform_3(%arg0: i32) -> (i32, i32) {
    %c0_i32 = arith.constant 0 : i32
    %c0_i32_0 = arith.constant 0 : i32
    return %arg0, %c0_i32 : i32, i32
  }
  func.func @transform_4(%arg0: i32) -> (i32, i32) {
    %c0_i32 = arith.constant 0 : i32
    %c0_i32_0 = arith.constant 0 : i32
    return %c0_i32, %arg0 : i32, i32
  }
  func.func @transform_5(%arg0: i32) -> (i32, i32) {
    %c0_i32 = arith.constant 0 : i32
    %c0_i32_0 = arith.constant 0 : i32
    %c0_i32_1 = arith.constant 0 : i32
    return %c0_i32, %c0_i32_0 : i32, i32
  }
  func.func @transform_6(%arg0: i32) -> (i32, i32) {
    %c0_i32 = arith.constant 0 : i32
    %c0_i32_0 = arith.constant 0 : i32
    %c0_i32_1 = arith.constant 0 : i32
    return %c0_i32, %c0_i32_0 : i32, i32
  }
}

</mosaic_0001>

<llo_original>
// kernel: dual_branch_contrast_g2l.1
$region0: #{dual_branch_contrast_g2l.1}
  #allocation0 [shape = 'u32[]', space=smem, size = 0x4, offset = 0x4, fixed_abs, tag = 'smem constant byte address 0x4 - core index']
  #allocation1 [shape = 'u32[72,128]{1,0:T(1,128)}', space=vmem, size = 0x9000, scoped, tag = 'internal scratch']
  #allocation2 [shape = 'f32[2,128]{1,0:T(2,128)}', space=vmem, size = 0x400, scoped, tag = 'scratch operand']
  #allocation3 [shape = 'f32[2,128]{1,0:T(2,128)}', space=vmem, size = 0x400, scoped, tag = 'scratch operand']
  %s0 = inlined_call_operand.vmem [shape: f32[2,32], index: 0, kind: input, shape index: {}]
  %s1 = inlined_call_operand.vmem [shape: f32[2,32], index: 1, kind: input, shape index: {}]
  %s2 = inlined_call_operand.hbm [shape: f32[16,32], index: 2, kind: input, shape index: {}]
  %s3 = inlined_call_operand.hbm [shape: f32[16,32], index: 3, kind: input, shape index: {}]
  %s4 = inlined_call_operand.vmem [shape: s32[1,16], index: 4, kind: input, shape index: {}]
  %s5 = inlined_call_operand.hbm [shape: f32[1,1], index: 5, kind: output, shape index: {0}]
  %s6 = inlined_call_operand.hbm [shape: f32[1,1], index: 6, kind: output, shape index: {1}]
  %7 = xla_tuple %s5, %s6
  %s8 = sld [smem:[#allocation0]]
  $region54: #{dual_branch_contrast_g2l.1} parent=0
    _
  %s10 = ssub.s32 1, %s8
  %s11 = scalar_select 0, %s10, %s8
  $region1: #{dual_branch_contrast_g2l.1} parent=0
    #allocation4 [shape = 'u8[65536]{0}', space=vmem, size = 0x10000, scoped, tag = 'input window, operand 2, single buffered']
    #allocation5 [shape = 's32[1]{0}', space=sflag, size = 0x4, scoped, tag = 'scoped memory for dual_branch_contrast_g2l.1']
    #allocation6 [shape = 's32[1]{0}', space=sflag, size = 0x4, scoped, tag = 'scoped memory for dual_branch_contrast_g2l.1']
    #allocation7 [shape = 'u8[65536]{0}', space=vmem, size = 0x10000, scoped, tag = 'input window, operand 3, single buffered']
    #allocation8 [shape = 's32[1]{0}', space=sflag, size = 0x4, scoped, tag = 'scoped memory for dual_branch_contrast_g2l.1']
    #allocation9 [shape = 'u8[512]{0}', space=vmem, size = 0x400, scoped, tag = 'output window, operand 0, single buffered']
    #allocation10 [shape = 'u8[512]{0}', space=vmem, size = 0x400, scoped, tag = 'output window, operand 1, single buffered']
    #allocation11 [shape = 's32[1]{0}', space=sflag, size = 0x4, scoped, tag = 'scoped memory for dual_branch_contrast_g2l.1']
    %12 = vsyncpa [#allocation5], 0
    %13 = vsyncpa [#allocation8], 0
    %14 = vsyncpa [#allocation6], 0
    %15 = vsyncpa [#allocation11], 0
    // Predicated region
    $region2: #{dual_branch_contrast_g2l.1} parent=1 // pred_check
      _
    $region3: #{dual_branch_contrast_g2l.1} parent=1 // pred_check_branch
      %17 = sbr.rel (0) target = $region5
    $region4: #{dual_branch_contrast_g2l.1} parent=1 // pred_region
      _
    $region5: #{dual_branch_contrast_g2l.1} parent=1 // pred_fallthru
      _
    // Predicated region
    $region6: #{dual_branch_contrast_g2l.1} parent=1 // pred_check
      _
    $region7: #{dual_branch_contrast_g2l.1} parent=1 // pred_check_branch
      %19 = sbr.rel (0) target = $region9
    $region8: #{dual_branch_contrast_g2l.1} parent=1 // pred_region
      _
    $region9: #{dual_branch_contrast_g2l.1} parent=1 // pred_fallthru
      _
    // Predicated region
    $region10: #{dual_branch_contrast_g2l.1} parent=1 // pred_check
      _
    $region11: #{dual_branch_contrast_g2l.1} parent=1 // pred_check_branch
      %21 = sbr.rel (0) target = $region13
    $region12: #{dual_branch_contrast_g2l.1} parent=1 // pred_region
      %23 = vsyncadd [#allocation5], 1792
      %s24 = sshll.u32 %s2, 4
      %s25 = int_to_ptr.hbm [resolvable:$true] %s24
      %s26 = sshll.u32 [#allocation4], 4
      %s27 = int_to_ptr.vmem [resolvable:$true] %s26
      %32 = dma.hbm_to_vmem [thread:$0]  %s25, 256, %s27, [#allocation5], 128, 128, 8
    $region13: #{dual_branch_contrast_g2l.1} parent=1 // pred_fallthru
      _
    // Predicated region
    $region14: #{dual_branch_contrast_g2l.1} parent=1 // pred_check
      _
    $region15: #{dual_branch_contrast_g2l.1} parent=1 // pred_check_branch
      %34 = sbr.rel (0) target = $region17
    $region16: #{dual_branch_contrast_g2l.1} parent=1 // pred_region
      %36 = vsyncadd [#allocation8], 1792
      %s37 = sshll.u32 %s3, 4
      %s38 = int_to_ptr.hbm [resolvable:$true] %s37
      %s39 = sshll.u32 [#allocation7], 4
      %s40 = int_to_ptr.vmem [resolvable:$true] %s39
      %45 = dma.hbm_to_vmem [thread:$0]  %s38, 256, %s40, [#allocation8], 128, 128, 8
    $region17: #{dual_branch_contrast_g2l.1} parent=1 // pred_fallthru
      _
    // Predicated region
    $region18: #{dual_branch_contrast_g2l.1} parent=1 // pred_check
      _
    $region19: #{dual_branch_contrast_g2l.1} parent=1 // pred_check_branch
      %47 = sbr.rel (0) target = $region21
    $region20: #{dual_branch_contrast_g2l.1} parent=1 // pred_region
      _
    $region21: #{dual_branch_contrast_g2l.1} parent=1 // pred_fallthru
      _
    // Predicated region
    $region22: #{dual_branch_contrast_g2l.1} parent=1 // pred_check
      _
    $region23: #{dual_branch_contrast_g2l.1} parent=1 // pred_check_branch
      %49 = sbr.rel (0) target = $region25
    $region24: #{dual_branch_contrast_g2l.1} parent=1 // pred_region
      %51 = dma.done [#allocation5], 2048
    $region25: #{dual_branch_contrast_g2l.1} parent=1 // pred_fallthru
      _
    // Predicated region
    $region26: #{dual_branch_contrast_g2l.1} parent=1 // pred_check
      _
    $region27: #{dual_branch_contrast_g2l.1} parent=1 // pred_check_branch
      %53 = sbr.rel (0) target = $region29
    $region28: #{dual_branch_contrast_g2l.1} parent=1 // pred_region
      %55 = dma.done [#allocation8], 2048
    $region29: #{dual_branch_contrast_g2l.1} parent=1 // pred_fallthru
      _
    %p56 = scmp.eq.s32.totalorder 0, 0
    // Predicated region
    $region30: #{dual_branch_contrast_g2l.1} parent=1 // pred_check
      %p57 = pneg %p56
    $region31: #{dual_branch_contrast_g2l.1} parent=1 // pred_check_branch
      %59 = sbr.rel (%p57) target = $region33
    $region32: #{dual_branch_contrast_g2l.1} parent=1 // pred_region
      %60 = vst [vmem:[#allocation2] sm:$0x3] 0.0
      %61 = vst [vmem:[#allocation3] sm:$0x3] 0.0
    $region33: #{dual_branch_contrast_g2l.1} parent=1 // pred_fallthru
      _
    %v62 = vlaneseq
    %v63 = vshrl.u32 %v62, 7
    %v64 = vld [vmem:[%s4] sm:$0x1]
    %v65 = vperm.slane %v64, 0
    %vm66 = vcmp.eq.s32.totalorder %v63, %v65
    %v67 = vsel %vm66, 1, 0
    %v68 = vcvt.s32.f32 %v67
    %v69 = vld [vmem:[%s0] sm:$0x3]
    %v70 = vld [vmem:[#allocation7] sm:$0xff]
    %v71 = vld [vmem:[#allocation7 + $0x8] sm:$0xff]
    %v72 = vld [vmem:[#allocation7 + $0x10] sm:$0xff]
    %v73 = vld [vmem:[#allocation7 + $0x18] sm:$0xff]
    %v74 = vld [vmem:[#allocation7 + $0x20] sm:$0xff]
    %v75 = vld [vmem:[#allocation7 + $0x28] sm:$0xff]
    %v76 = vld [vmem:[#allocation7 + $0x30] sm:$0xff]
    %v77 = vld [vmem:[#allocation7 + $0x38] sm:$0xff]
    %v78 = vld [vmem:[#allocation7 + $0x40] sm:$0xff]
    %v79 = vld [vmem:[#allocation7 + $0x48] sm:$0xff]
    %v80 = vld [vmem:[#allocation7 + $0x50] sm:$0xff]
    %v81 = vld [vmem:[#allocation7 + $0x58] sm:$0xff]
    %v82 = vld [vmem:[#allocation7 + $0x60] sm:$0xff]
    %v83 = vld [vmem:[#allocation7 + $0x68] sm:$0xff]
    %v84 = vld [vmem:[#allocation7 + $0x70] sm:$0xff]
    %v85 = vld [vmem:[#allocation7 + $0x78] sm:$0xff]
    %vm86 = vcmask 261120
    %v88 = vsel %vm86, %v69, 0
    %v91 = vsel %vm86, %v70, 0
    %v94 = vsel %vm86, %v71, 0
    %v97 = vsel %vm86, %v72, 0
    %v100 = vsel %vm86, %v73, 0
    %v103 = vsel %vm86, %v74, 0
    %v106 = vsel %vm86, %v75, 0
    %v109 = vsel %vm86, %v76, 0
    %v112 = vsel %vm86, %v77, 0
    %v115 = vsel %vm86, %v78, 0
    %v118 = vsel %vm86, %v79, 0
    %v121 = vsel %vm86, %v80, 0
    %v124 = vsel %vm86, %v81, 0
    %v127 = vsel %vm86, %v82, 0
    %v130 = vsel %vm86, %v83, 0
    %v133 = vsel %vm86, %v84, 0
    %v136 = vsel %vm86, %v85, 0
    %138 = vmatpush.xpose.msra.mxu0 %v136
    %139 = vmatpush.xpose.msra.mxu0 %v133
    %140 = vmatpush.xpose.msra.mxu0 %v130
    %141 = vmatpush.xpose.msra.mxu0 %v127
    %142 = vmatpush.xpose.msra.mxu0 %v124
    %143 = vmatpush.xpose.msra.mxu0 %v121
    %144 = vmatpush.xpose.msra.mxu0 %v118
    %145 = vmatpush.xpose.msra.mxu0 %v115
    %146 = vmatpush.xpose.msra.mxu0 %v112
    %147 = vmatpush.xpose.msra.mxu0 %v109
    %148 = vmatpush.xpose.msra.mxu0 %v106
    %149 = vmatpush.xpose.msra.mxu0 %v103
    %150 = vmatpush.xpose.msra.mxu0 %v100
    %151 = vmatpush.xpose.msra.mxu0 %v97
    %152 = vmatpush.xpose.msra.mxu0 %v94
    %153 = vmatpush.xpose.msra.mxu0 %v91
    %154 = vmatmul.f32.gmra.mxu0 %v88
    %v155 = vpop.f32.mrf.mxu0
    %v156 = vadd.f32 0.0, %v155
    %157 = vdwg.mxu0
    %v158 = vld [vmem:[%s1] sm:$0x3]
    %v159 = vld [vmem:[#allocation4] sm:$0xff]
    %v160 = vld [vmem:[#allocation4 + $0x8] sm:$0xff]
    %v161 = vld [vmem:[#allocation4 + $0x10] sm:$0xff]
    %v162 = vld [vmem:[#allocation4 + $0x18] sm:$0xff]
    %v163 = vld [vmem:[#allocation4 + $0x20] sm:$0xff]
    %v164 = vld [vmem:[#allocation4 + $0x28] sm:$0xff]
    %v165 = vld [vmem:[#allocation4 + $0x30] sm:$0xff]
    %v166 = vld [vmem:[#allocation4 + $0x38] sm:$0xff]
    %v167 = vld [vmem:[#allocation4 + $0x40] sm:$0xff]
    %v168 = vld [vmem:[#allocation4 + $0x48] sm:$0xff]
    %v169 = vld [vmem:[#allocation4 + $0x50] sm:$0xff]
    %v170 = vld [vmem:[#allocation4 + $0x58] sm:$0xff]
    %v171 = vld [vmem:[#allocation4 + $0x60] sm:$0xff]
    %v172 = vld [vmem:[#allocation4 + $0x68] sm:$0xff]
    %v173 = vld [vmem:[#allocation4 + $0x70] sm:$0xff]
    %v174 = vld [vmem:[#allocation4 + $0x78] sm:$0xff]
    %v176 = vsel %vm86, %v158, 0
    %v179 = vsel %vm86, %v159, 0
    %v182 = vsel %vm86, %v160, 0
    %v185 = vsel %vm86, %v161, 0
    %v188 = vsel %vm86, %v162, 0
    %v191 = vsel %vm86, %v163, 0
    %v194 = vsel %vm86, %v164, 0
    %v197 = vsel %vm86, %v165, 0
    %v200 = vsel %vm86, %v166, 0
    %v203 = vsel %vm86, %v167, 0
    %v206 = vsel %vm86, %v168, 0
    %v209 = vsel %vm86, %v169, 0
    %v212 = vsel %vm86, %v170, 0
    %v215 = vsel %vm86, %v171, 0
    %v218 = vsel %vm86, %v172, 0
    %v221 = vsel %vm86, %v173, 0
    %v224 = vsel %vm86, %v174, 0
    %226 = vmatpush.xpose.msra.mxu0 %v224
    %227 = vmatpush.xpose.msra.mxu0 %v221
    %228 = vmatpush.xpose.msra.mxu0 %v218
    %229 = vmatpush.xpose.msra.mxu0 %v215
    %230 = vmatpush.xpose.msra.mxu0 %v212
    %231 = vmatpush.xpose.msra.mxu0 %v209
    %232 = vmatpush.xpose.msra.mxu0 %v206
    %233 = vmatpush.xpose.msra.mxu0 %v203
    %234 = vmatpush.xpose.msra.mxu0 %v200
    %235 = vmatpush.xpose.msra.mxu0 %v197
    %236 = vmatpush.xpose.msra.mxu0 %v194
    %237 = vmatpush.xpose.msra.mxu0 %v191
    %238 = vmatpush.xpose.msra.mxu0 %v188
    %239 = vmatpush.xpose.msra.mxu0 %v185
    %240 = vmatpush.xpose.msra.mxu0 %v182
    %241 = vmatpush.xpose.msra.mxu0 %v179
    %242 = vmatmul.f32.gmra.mxu0 %v176
    %v243 = vpop.f32.mrf.mxu0
    %v244 = vadd.f32 0.0, %v243
    %245 = vdwg.mxu0
    %v246 = vmax.f32 %v156, 0.0
    %v247 = vand.u32 2147483647, %v156
    %v248 = vsub.f32 0.0, %v247
    %v249 = vmul.f32 %v248, 1.442695
    %v250 = vpow.pop %v249
    %v251 = vadd.f32 %v250, 1.0
    %v252 = vlog2.pop %v251
    %v253 = vmul.f32 %v252, 0.6931472
    %v254 = vmul.f32 -0.5, %v250
    %v255 = vadd.f32 %v254, 1.0
    %v256 = vmul.f32 %v255, %v250
    %v257 = vand.u32 2147483647, %v250
    %vm258 = vcmp.lt.f32.partialorder %v257, 0.0004427343
    %v259 = vsel %vm258, %v256, %v253
    %v260 = vadd.f32 %v246, %v259
    %v261 = vsub.f32 %v260, 0.6931472
    %v262 = vsub.f32 %v156, %v261
    %v263 = vmul.f32 %v68, %v262
    %v264 = vmul.f32 %v68, %v261
    %v265 = vsub.f32 %v261, %v264
    %v266 = vmax.f32 %v244, 0.0
    %v267 = vand.u32 2147483647, %v244
    %v268 = vsub.f32 0.0, %v267
    %v269 = vmul.f32 %v268, 1.442695
    %v270 = vpow.pop %v269
    %v271 = vadd.f32 %v270, 1.0
    %v272 = vlog2.pop %v271
    %v273 = vmul.f32 %v272, 0.6931472
    %v274 = vmul.f32 -0.5, %v270
    %v275 = vadd.f32 %v274, 1.0
    %v276 = vmul.f32 %v275, %v270
    %v277 = vand.u32 2147483647, %v270
    %vm278 = vcmp.lt.f32.partialorder %v277, 0.0004427343
    %v279 = vsel %vm278, %v276, %v273
    %v280 = vadd.f32 %v266, %v279
    %v281 = vsub.f32 %v280, 0.6931472
    %v282 = vsub.f32 %v244, %v281
    %v283 = vmul.f32 %v68, %v282
    %v284 = vmul.f32 %v68, %v281
    %v285 = vsub.f32 %v281, %v284
    %v286 = vadd.f32 %v263, %v283
    %v287 = vadd.f32 %v265, %v285
    %v288 = vlaneseq
    %v289 = vand.u32 %v288, 127
    %s290 = smul.u32 0, 128
    %v291 = vstv %s290
    %v292 = vadd.s32 %v291, %v289
    %vm293 = vcmp.lt.s32.totalorder %v292, 16
    %v294 = vsel %vm293, %v286, 0.0
    %v295 = vsel %vm293, %v287, 0.0
    %v296 = vld [vmem:[#allocation2] sm:$0x3]
    %v297 = vadd.f32 %v296, %v294
    %298 = vst [vmem:[#allocation2] sm:$0x3] %v297
    %v299 = vld [vmem:[#allocation3] sm:$0x3]
    %v300 = vadd.f32 %v299, %v295
    %301 = vst [vmem:[#allocation3] sm:$0x3] %v300
    // Predicated region
    $region34: #{dual_branch_contrast_g2l.1} parent=1 // pred_check
      %p302 = pneg %p56
    $region35: #{dual_branch_contrast_g2l.1} parent=1 // pred_check_branch
      %304 = sbr.rel (%p302) target = $region37
    $region36: #{dual_branch_contrast_g2l.1} parent=1 // pred_region
      %v305 = vld [vmem:[#allocation2] sm:$0x3]
      %vm306 = vcmask 1041408
      %v307 = vsel %vm306, %v305, 0.0
      %308 = vadd.xlane.f32.xlu0 %v307
      %v309 = vpop.xlane.xlu0 %308
      %v310 = vrot.slane %v309, 4
      %v311 = vadd.f32 %v309, %v310
      %v312 = vrot.slane %v311, 2
      %v313 = vadd.f32 %v311, %v312
      %v314 = vrot.slane %v313, 1
      %v315 = vadd.f32 %v313, %v314
      %s316 = vtos %v315
      %v317 = vstv %s316
      %vm318 = vcmask 0
      %319 = vst.msk [vmem:[#allocation9] sm:$0x1] %vm318, %v317
      %v320 = vld [vmem:[#allocation3] sm:$0x3]
      %v321 = vsel %vm306, %v320, 0.0
      %322 = vadd.xlane.f32.xlu0 %v321
      %v323 = vpop.xlane.xlu0 %322
      %v324 = vrot.slane %v323, 4
      %v325 = vadd.f32 %v323, %v324
      %v326 = vrot.slane %v325, 2
      %v327 = vadd.f32 %v325, %v326
      %v328 = vrot.slane %v327, 1
      %v329 = vadd.f32 %v327, %v328
      %s330 = vtos %v329
      %v331 = vstv %s330
      %332 = vst.msk [vmem:[#allocation10] sm:$0x1] %vm318, %v331
    $region37: #{dual_branch_contrast_g2l.1} parent=1 // pred_fallthru
      _
    // Predicated region
    $region38: #{dual_branch_contrast_g2l.1} parent=1 // pred_check
      _
    $region39: #{dual_branch_contrast_g2l.1} parent=1 // pred_check_branch
      %334 = sbr.rel (0) target = $region41
    $region40: #{dual_branch_contrast_g2l.1} parent=1 // pred_region
      %336 = vsyncadd [#allocation6], 0
      %s338 = sshll.u32 [#allocation9], 4
      %s339 = int_to_ptr.vmem [resolvable:$true] %s338
      %s340 = sshll.u32 %s5, 4
      %s341 = int_to_ptr.hbm [resolvable:$true] %s340
      %343 = dma.vmem_to_hbm [thread:$0]  %s339, 16, %s341, [#allocation6]
    $region41: #{dual_branch_contrast_g2l.1} parent=1 // pred_fallthru
      _
    // Predicated region
    $region42: #{dual_branch_contrast_g2l.1} parent=1 // pred_check
      _
    $region43: #{dual_branch_contrast_g2l.1} parent=1 // pred_check_branch
      %345 = sbr.rel (0) target = $region45
    $region44: #{dual_branch_contrast_g2l.1} parent=1 // pred_region
      %347 = vsyncadd [#allocation11], 0
      %s349 = sshll.u32 [#allocation10], 4
      %s350 = int_to_ptr.vmem [resolvable:$true] %s349
      %s351 = sshll.u32 %s6, 4
      %s352 = int_to_ptr.hbm [resolvable:$true] %s351
      %354 = dma.vmem_to_hbm [thread:$0]  %s350, 16, %s352, [#allocation11]
    $region45: #{dual_branch_contrast_g2l.1} parent=1 // pred_fallthru
      _
    // Predicated region
    $region46: #{dual_branch_contrast_g2l.1} parent=1 // pred_check
      _
    $region47: #{dual_branch_contrast_g2l.1} parent=1 // pred_check_branch
      %356 = sbr.rel (0) target = $region49
    $region48: #{dual_branch_contrast_g2l.1} parent=1 // pred_region
      %358 = dma.done [#allocation6], 16
    $region49: #{dual_branch_contrast_g2l.1} parent=1 // pred_fallthru
      _
    // Predicated region
    $region50: #{dual_branch_contrast_g2l.1} parent=1 // pred_check
      _
    $region51: #{dual_branch_contrast_g2l.1} parent=1 // pred_check_branch
      %360 = sbr.rel (0) target = $region53
    $region52: #{dual_branch_contrast_g2l.1} parent=1 // pred_region
      %362 = dma.done [#allocation11], 16
    $region53: #{dual_branch_contrast_g2l.1} parent=1 // pred_fallthru
      _
    %363 = vsyncpa [#allocation5], 1
    %364 = vsyncpa [#allocation8], 1
    %365 = vsyncpa [#allocation6], 1
    %366 = vsyncpa [#allocation11], 1

</llo_original>
